<compile_context>
chip_gen: v5e
topology: v5e:2x2
jax: 0.10.0
libtpu: 0.0.40
codegen_flags: <defaults>
</compile_context>

<pallas_src>
from functools import partial

import numpy as np
import jax
import jax.numpy as jnp
from jax.experimental import pallas as pl
from jax.experimental.pallas import tpu as pltpu


# ---------------------------------------------------------------------------
# Hardware query (generation-aware VMEM budgets)
# ---------------------------------------------------------------------------

def _vmem_capacity_bytes():
    try:
        info = pltpu.get_tpu_info()
        cap = getattr(info, "vmem_capacity_bytes", None)
        if cap:
            return int(cap)
    except Exception:
        pass
    return 64 * 1024 * 1024   # conservative default (v7x per-TensorCore)


# ---------------------------------------------------------------------------
# Kernel 1: rho = H^dagger @ H / Tr(H^dagger @ H)
#   inputs pre-stacked: x = [h_re; h_im], y = [h_im; -h_re]  (both (2d, d))
#   output: (2d, d) = [rho_re; rho_im]  (row-major reshape == lane-dense rho vector)
# ---------------------------------------------------------------------------

def _rho_kernel(x_ref, y_ref, out_ref):
    x = x_ref[...]
    y = y_ref[...]
    d = x.shape[0] // 2
    # Tr(H^dagger H) == ||H||_F^2 == sum(x*x): pure VPU elementwise + one reduce.
    inv_tr = 1.0 / jnp.sum(x * x)
    # Two MXU passes instead of four: contraction depth 2d fills the systolic array better.
    rre = jax.lax.dot_general(x, x, (((0,), (0,)), ((), ())),
                              preferred_element_type=jnp.float32)
    rim = jax.lax.dot_general(x, y, (((0,), (0,)), ((), ())),
                              preferred_element_type=jnp.float32)
    out_ref[:d, :] = rre * inv_tr
    out_ref[d:, :] = rim * inv_tr


def compute_rho_pallas(x, y):
    two_d, d = x.shape
    return pl.pallas_call(
        _rho_kernel,
        out_shape=jax.ShapeDtypeStruct((two_d, d), jnp.float32),
    )(x, y)


# ---------------------------------------------------------------------------
# Kernel 2: P[k] = Re Tr(rho @ M_k), streamed over contiguous ROW tiles of A
#   A: (KN_pad, 2*d*d), row k = [vec(Re M_k^T), -vec(Im M_k^T)]
#   rho_col: (2*d*d, 1) = [vec(rho_re); vec(rho_im)]
# ---------------------------------------------------------------------------

def _measure_kernel(a_ref, rho_ref, p_ref):
    # (tile_r, 2d^2) @ (2d^2, 1) -> (tile_r, 1): one MXU matvec per contiguous A tile.
    p_ref[...] = jnp.dot(a_ref[...], rho_ref[...],
                         preferred_element_type=jnp.float32)


def _choose_tile_r(kn_pad, rows, itemsize, budget_bytes):
    # Largest power-of-two row tile within the per-buffer budget; once kn_pad >= 512 keep the
    # grid at >= 4 steps so double-buffering overlaps and v7x's two TensorCores share the
    # stream.  Falls back to the minimum (8-row) tile if even one 128-row tile exceeds budget.
    max_tile = kn_pad if kn_pad < 512 else kn_pad // 4
    tile_r = 8
    t = 8
    while t <= max_tile:
        if kn_pad % t == 0 and rows * t * itemsize <= budget_bytes:
            tile_r = t
        t *= 2
    return tile_r


def measure_rho(a_rows, rho_col):
    kn_pad, rows = a_rows.shape
    itemsize = jnp.dtype(a_rows.dtype).itemsize
    cap = _vmem_capacity_bytes()
    budget = min(16 * 1024 * 1024, cap // 6)          # per A buffer (double-buffered by Pallas)
    tile_r = _choose_tile_r(kn_pad, rows, itemsize, budget)
    grid = (kn_pad // tile_r,)

    a_buf = rows * tile_r * itemsize                  # one A tile
    rho_buf = rows * 512                              # (rows,1) lane-padded, f32 upper bound
    out_buf = tile_r * 512                            # (tile_r,1) lane-padded f32
    vmem_bytes = 2 * (a_buf + rho_buf + out_buf) + (4 << 20)   # + Mosaic scratch headroom
    vmem_limit = int(min(max(vmem_bytes, 16 << 20), int(cap * 0.9)))

    cost = pl.CostEstimate(
        flops=2 * kn_pad * rows,
        transcendentals=0,
        bytes_accessed=kn_pad * rows * itemsize + rows * itemsize + kn_pad * 4)

    return pl.pallas_call(
        _measure_kernel,
        grid=grid,
        in_specs=[
            pl.BlockSpec((tile_r, rows), lambda i: (i, 0)),   # A: contiguous row tiles, streamed
            pl.BlockSpec((rows, 1), lambda i: (0, 0)),        # rho col: fetched once, resident
        ],
        out_specs=pl.BlockSpec((tile_r, 1), lambda i: (i, 0)),
        out_shape=jax.ShapeDtypeStruct((kn_pad, 1), jnp.float32),
        compiler_params=pltpu.CompilerParams(
            dimension_semantics=("parallel",),
            vmem_limit_bytes=vmem_limit,
        ),
        cost_estimate=cost,
    )(a_rows, rho_col)


# ---------------------------------------------------------------------------
# Host-side constants: tetrahedral POVM and its (cached) tensor-product matrix
# ---------------------------------------------------------------------------

def tetrahedral_povm():
    """Standard tetrahedral POVM, K=4, each element 2x2 Hermitian PSD, sums to I."""
    s = np.array([
        [0.0, 0.0, 1.0],
        [2.0 * np.sqrt(2.0) / 3.0, 0.0, -1.0 / 3.0],
        [-np.sqrt(2.0) / 3.0, np.sqrt(2.0 / 3.0), -1.0 / 3.0],
        [-np.sqrt(2.0) / 3.0, -np.sqrt(2.0 / 3.0), -1.0 / 3.0],
    ])
    eye = np.eye(2, dtype=np.complex128)
    sx = np.array([[0, 1], [1, 0]], dtype=np.complex128)
    sy = np.array([[0, -1j], [1j, 0]], dtype=np.complex128)
    sz = np.array([[1, 0], [0, -1]], dtype=np.complex128)
    return np.stack([(eye + s[k, 0] * sx + s[k, 1] * sy + s[k, 2] * sz) / 4.0
                     for k in range(4)])


def povm_tensor_product(M, n_qubits):
    """All K^N tensor products M_{k1} (x) ... (x) M_{kN}; k1 is the most-significant index."""
    A = M
    for _ in range(n_qubits - 1):
        Ka, da = A.shape[0], A.shape[1]
        Kb, db = M.shape[0], M.shape[1]
        A = np.einsum('aij,bkl->abikjl', A, M).reshape(Ka * Kb, da * db, da * db)
    return A  # (K**N, d, d) complex


def build_povm_matrix(M, n_qubits, dtype=jnp.bfloat16):
    """Build the measurement matrix ONCE: shape (KN_pad, 2*d*d), row k =
    [vec(Re M_k^T), -vec(Im M_k^T)] so that P[k] = A[k,:] . [vec(rho_re); vec(rho_im)].
    Row-major rows => contiguous HBM DMA runs when streaming row tiles."""
    A = povm_tensor_product(np.asarray(M, dtype=np.complex128), n_qubits)   # (KN, d, d)
    kn, d, _ = A.shape
    At = A.transpose(0, 2, 1).reshape(kn, d * d)                            # row k = vec(M_k^T)
    rows_mat = np.concatenate([At.real, -At.imag], axis=1)                  # (KN, 2*d*d)
    kn_pad = max(((kn + 127) // 128) * 128, 128)                            # sublane-friendly pad
    if kn_pad != kn:
        rows_mat = np.concatenate(
            [rows_mat, np.zeros((kn_pad - kn, rows_mat.shape[1]), dtype=rows_mat.dtype)], axis=0)
    return jnp.asarray(rows_mat, dtype=dtype), kn


# ---------------------------------------------------------------------------
# XLA fallback for large N: qubit-by-qubit Kronecker-factored contraction
# ---------------------------------------------------------------------------

def qmt_factored(rho_re, rho_im, m_complex, n_qubits):
    """P[k1..kN] = Tr(rho * (M_{k1} x ... x M_{kN})) via per-qubit contraction.
    O(N*4^N) work and ~KiB operands vs the 16^N dense matrix (mandatory for N >= 6)."""
    # TODO(synk): Pallas port not worthwhile: per-step dims of 2/4 are vreg-padding dominated.
    N = n_qubits
    rho = (rho_re + 1j * rho_im).astype(jnp.complex64)
    T = rho.reshape((2,) * N + (2,) * N)          # axes (i_1..i_N, j_1..j_N), rho[i, j]
    for n in range(N):
        ni = N - n
        i_ax = n                                  # first remaining i axis
        j_ax = n + ni                             # first remaining j axis
        # sum_{i,j} M[k, j, i] * T[..., i, ..., j, ...]
        T = jnp.tensordot(m_complex, T, axes=((1, 2), (j_ax, i_ax)))
        T = jnp.moveaxis(T, 0, n)                 # keep k_1..k_{n+1} leading, in order
    return jnp.real(T.reshape(-1))


# ---------------------------------------------------------------------------
# Forward pass
# ---------------------------------------------------------------------------

def _params_to_rho_cat(params, n_qubits, map_method, rho_impl):
    """T -> H -> rho; returns stacked (2d, d) float32 = [rho_re; rho_im]."""
    d = 2 ** n_qubits
    params = params.astype(jnp.float32)
    if map_method in ('fac_t', 'fac_h'):
        h_re = jnp.tril(params)            # real part: lower triangle (incl. diag)
        h_im = jnp.triu(params, 1).T       # imag part: strict upper transposed into lower
        if map_method == 'fac_h':
            h_re = h_re + jnp.tril(h_re, -1).T   # H += tril(H,-1).T.conj()  -> Hermitian H
            h_im = h_im - h_im.T
    elif map_method == 'fac_a':
        h_re = params[:, :d]
        h_im = params[:, d:]
    else:
        raise NotImplementedError(map_method)

    # X = [h_re; h_im], Y = [h_im; -h_re]: rho_re = X^T X, rho_im = X^T Y, Tr = sum(X*X)
    x = jnp.concatenate([h_re, h_im], axis=0)
    y = jnp.concatenate([h_im, -h_re], axis=0)

    use_pallas_rho = (rho_impl == 'pallas' and d >= 8) or (rho_impl == 'auto' and d >= 64)
    if use_pallas_rho:
        return compute_rho_pallas(x, y)
    # Small d: a d<=32 matmul is sub-microsecond; an extra pallas_call launch would dominate,
    # so it stays in XLA and fuses with the triangular glue above.
    inv_tr = 1.0 / jnp.sum(x * x)
    rho_re = jnp.dot(x.T, x, preferred_element_type=jnp.float32) * inv_tr
    rho_im = jnp.dot(x.T, y, preferred_element_type=jnp.float32) * inv_tr
    return jnp.concatenate([rho_re, rho_im], axis=0)


def ugd_forward_dense(params, a_rows, p_idxs, *, n_qubits, kn, map_method, rho_impl):
    d = 2 ** n_qubits
    rho_cat = _params_to_rho_cat(params, n_qubits, map_method, rho_impl)   # (2d, d)
    # Row-major reshape of the stacked output == [vec(rho_re); vec(rho_im)] column.
    rho_col = rho_cat.reshape(2 * d * d, 1).astype(a_rows.dtype)
    p_pad = measure_rho(a_rows, rho_col)                                   # (KN_pad, 1) f32
    p_all = p_pad[:kn, 0]
    return jnp.take(p_all, p_idxs)


def ugd_forward_factored(params, m_complex, p_idxs, *, n_qubits, kn, map_method, rho_impl):
    d = 2 ** n_qubits
    rho_cat = _params_to_rho_cat(params, n_qubits, map_method, rho_impl)
    p_all = qmt_factored(rho_cat[:d], rho_cat[d:], m_complex, n_qubits)[:kn]
    return jnp.take(p_all, p_idxs)


class UGDPallas:
    """Mirror of UGD_nn: POVM constants built/uploaded once at construction; forward jitted.

    a_dtype: storage dtype of the streamed POVM matrix (bfloat16 default: ~2x on the
             HBM-bound measurement; float32 reproduces the reference to <=1e-4).
    rho_impl: 'auto' (XLA for d<64, Pallas otherwise) | 'pallas' | 'xla'.
    dense_max_qubits: above this, use the Kronecker-factored XLA contraction instead of the
             dense POVM matrix (dense A is 8*16^N bytes: >=128 MiB at N=6)."""

    def __init__(self, n_qubits, p_idxs, M=None, map_method='fac_h',
                 a_dtype=jnp.bfloat16, rho_impl='auto', dense_max_qubits=5):
        if M is None:
            M = tetrahedral_povm()
        M = np.asarray(M)
        self.n_qubits = n_qubits
        self.d = 2 ** n_qubits
        self.map_method = map_method
        self.p_idxs = jnp.asarray(np.asarray(p_idxs), dtype=jnp.int32)
        self.use_dense = n_qubits <= dense_max_qubits
        if self.use_dense:
            self.a_rows, self.kn = build_povm_matrix(M, n_qubits, dtype=a_dtype)  # built ONCE
            self._aux = self.a_rows
            fwd = ugd_forward_dense
        else:
            self.kn = int(M.shape[0]) ** n_qubits
            self.m_c = jnp.asarray(M, dtype=jnp.complex64)
            self._aux = self.m_c
            fwd = ugd_forward_factored
        self._fwd = jax.jit(partial(fwd, n_qubits=n_qubits, kn=self.kn,
                                    map_method=map_method, rho_impl=rho_impl))

    def __call__(self, params):
        return self._fwd(params, self._aux, self.p_idxs)


# ---------------------------------------------------------------------------
# Pure numpy reference (mirrors the PyTorch forward, map_method='fac_h')
# ---------------------------------------------------------------------------

def reference_forward(params_np, M_np, p_idxs_np, n_qubits):
    T = params_np.astype(np.float64)
    H = np.tril(T) + 1j * np.triu(T, 1).T
    H = H + np.conj(np.tril(H, -1).T)
    rho = H.conj().T @ H
    rho = rho / np.trace(rho)
    A = povm_tensor_product(M_np, n_qubits)
    P_all = np.real(np.einsum('kij,ji->k', A, rho))
    return P_all[p_idxs_np]


if __name__ == "__main__":
    n_qubits = 3          # d = 8, K^N = 64
    d = 2 ** n_qubits

    key = jax.random.PRNGKey(0)
    params = jax.random.normal(key, (d, d), dtype=jnp.float32)   # nn.Parameter(d, d)

    M_np = tetrahedral_povm()                                    # (K, 2, 2) POVM
    p_idxs_np = np.arange(0, 4 ** n_qubits, 2, dtype=np.int32)   # subset of outcomes

    ref = reference_forward(np.asarray(params), M_np, p_idxs_np, n_qubits)

    # 1) Default config: bf16 POVM stream (halved HBM traffic), XLA rho at small d,
    #    Pallas streaming measurement kernel.  bf16 storage needs a looser tolerance.
    model_bf16 = UGDPallas(n_qubits, p_idxs_np, M_np, map_method='fac_h')
    out_bf16 = jax.block_until_ready(model_bf16(params))
    np.testing.assert_allclose(np.asarray(out_bf16, dtype=np.float64), ref,
                               rtol=5e-2, atol=2e-3)

    # 2) float32 POVM + forced Pallas rho kernel: exercises both Pallas kernels and
    #    reproduces the reference at the original tight tolerance.
    model_f32 = UGDPallas(n_qubits, p_idxs_np, M_np, map_method='fac_h',
                          a_dtype=jnp.float32, rho_impl='pallas')
    out_f32 = jax.block_until_ready(model_f32(params))
    np.testing.assert_allclose(np.asarray(out_f32, dtype=np.float64), ref,
                               rtol=1e-4, atol=1e-6)
    out_f32b = jax.block_until_ready(model_f32(params))   # cached executable + device POVM reuse
    np.testing.assert_allclose(np.asarray(out_f32b, dtype=np.float64), ref,
                               rtol=1e-4, atol=1e-6)

    # 3) Kronecker-factored fallback (the n_qubits >= 6 path) validated at small N.
    model_fac = UGDPallas(n_qubits, p_idxs_np, M_np, map_method='fac_h', dense_max_qubits=0)
    out_fac = jax.block_until_ready(model_fac(params))
    np.testing.assert_allclose(np.asarray(out_fac, dtype=np.float64), ref,
                               rtol=1e-4, atol=1e-6)

    print("KERNEL_OK")
</pallas_src>

<mosaic_0001>
module attributes {stable_mosaic.version = 11 : i64} {
  func.func @_measure_kernel(%arg0: i32, %arg1: memref<128x128xbf16, #tpu.memory_space<vmem>>, %arg2: memref<128x1xbf16, #tpu.memory_space<vmem>>, %arg3: memref<128x1xf32, #tpu.memory_space<vmem>>) attributes {dimension_semantics = [#tpu.dimension_semantics<parallel>], iteration_bounds = array<i64: 1>, scalar_prefetch = 0 : i64, scratch_operands = 0 : i64, tpu.core_type = #tpu.core_type<tc>, window_params = [{transform_indices = @transform_0, window_bounds = array<i64: 128, 128>}, {pipeline_mode = #tpu.pipeline_mode<synchronous>, transform_indices = @transform_1, window_bounds = array<i64: 128, 1>}, {transform_indices = @transform_2, window_bounds = array<i64: 128, 1>}]} {
    %c0 = arith.constant 0 : index
    %c0_0 = arith.constant 0 : index
    %0 = vector.load %arg1[%c0, %c0_0] : memref<128x128xbf16, #tpu.memory_space<vmem>>, vector<128x128xbf16>
    %c0_1 = arith.constant 0 : index
    %c0_2 = arith.constant 0 : index
    %1 = vector.load %arg2[%c0_1, %c0_2] : memref<128x1xbf16, #tpu.memory_space<vmem>>, vector<128x1xbf16>
    %cst = arith.constant dense<0.000000e+00> : vector<128x1xf32>
    %2 = tpu.matmul %0, %1, %cst {dimension_numbers = #tpu.dot_dimension_numbers<[1], [0], [0], [1], [0, 0, 1, 1], [], []>} : vector<128x128xbf16>, vector<128x1xbf16>, vector<128x1xf32> -> vector<128x1xf32>
    %c0_3 = arith.constant 0 : index
    %c0_4 = arith.constant 0 : index
    %3 = vector.load %arg3[%c0_3, %c0_4] : memref<128x1xf32, #tpu.memory_space<vmem>>, vector<128x1xf32>
    tpu.vector_store %arg3[%c0_3, %c0_4], %2 {strides = array<i32>} : memref<128x1xf32, #tpu.memory_space<vmem>>, vector<128x1xf32>,
    return
  }
  func.func @transform_0(%arg0: i32) -> (i32, i32) {
    %c0_i32 = arith.constant 0 : i32
    %c0_i32_0 = arith.constant 0 : i32
    return %arg0, %c0_i32 : i32, i32
  }
  func.func @transform_1(%arg0: i32) -> (i32, i32) {
    %c0_i32 = arith.constant 0 : i32
    %c0_i32_0 = arith.constant 0 : i32
    %c0_i32_1 = arith.constant 0 : i32
    return %c0_i32, %c0_i32_0 : i32, i32
  }
  func.func @transform_2(%arg0: i32) -> (i32, i32) {
    %c0_i32 = arith.constant 0 : i32
    %c0_i32_0 = arith.constant 0 : i32
    return %arg0, %c0_i32 : i32, i32
  }
}

</mosaic_0001>

<llo_original>
// kernel: ugd_forward_dense.1
$region0: #{ugd_forward_dense.1}
  #allocation0 [shape = 'u32[]', space=smem, size = 0x4, offset = 0x4, fixed_abs, tag = 'smem constant byte address 0x4 - core index']
  #allocation1 [shape = 'u32[72,128]{1,0:T(1,128)}', space=vmem, size = 0x9000, scoped, tag = 'internal scratch']
  %s0 = inlined_call_operand.vmem [shape: bf16[128,128], index: 0, kind: input, shape index: {}]
  %s1 = inlined_call_operand.vmem [shape: bf16[128,1], index: 1, kind: input, shape index: {}]
  %s2 = inlined_call_operand.vmem [shape: f32[128,1], index: 2, kind: output, shape index: {}]
  %s3 = sld [smem:[#allocation0]]
  $region18: #{ugd_forward_dense.1} parent=0
    _
  %s5 = ssub.s32 1, %s3
  %s6 = scalar_select 0, %s5, %s3
  // Predicated region
  $region2: #{ugd_forward_dense.1} parent=0 // pred_check
    _
  $region3: #{ugd_forward_dense.1} parent=0 // pred_check_branch
    %8 = sbr.rel (0) target = $region5
  $region4: #{ugd_forward_dense.1} parent=0 // pred_region
    _
  $region5: #{ugd_forward_dense.1} parent=0 // pred_fallthru
    _
  // Predicated region
  $region6: #{ugd_forward_dense.1} parent=0 // pred_check
    _
  $region7: #{ugd_forward_dense.1} parent=0 // pred_check_branch
    %10 = sbr.rel (0) target = $region9
  $region8: #{ugd_forward_dense.1} parent=0 // pred_region
    _
  $region9: #{ugd_forward_dense.1} parent=0 // pred_fallthru
    _
  %v11 = vld [vmem:[%s0] sm:$0xf]
  %v12 = vld [vmem:[%s0 + $0x4] sm:$0xf]
  %v13 = vld [vmem:[%s0 + $0x8] sm:$0xf]
  %v14 = vld [vmem:[%s0 + $0xc] sm:$0xf]
  %v15 = vld [vmem:[%s0 + $0x10] sm:$0xf]
  %v16 = vld [vmem:[%s0 + $0x14] sm:$0xf]
  %v17 = vld [vmem:[%s0 + $0x18] sm:$0xf]
  %v18 = vld [vmem:[%s0 + $0x1c] sm:$0xf]
  %v19 = vld [vmem:[%s0 + $0x20] sm:$0xf]
  %v20 = vld [vmem:[%s0 + $0x24] sm:$0xf]
  %v21 = vld [vmem:[%s0 + $0x28] sm:$0xf]
  %v22 = vld [vmem:[%s0 + $0x2c] sm:$0xf]
  %v23 = vld [vmem:[%s0 + $0x30] sm:$0xf]
  %v24 = vld [vmem:[%s0 + $0x34] sm:$0xf]
  %v25 = vld [vmem:[%s0 + $0x38] sm:$0xf]
  %v26 = vld [vmem:[%s0 + $0x3c] sm:$0xf]
  %v27 = vld [vmem:[%s1] sm:$0xf]
  %v28 = vld [vmem:[%s1 + $0x4] sm:$0xf]
  %v29 = vld [vmem:[%s1 + $0x8] sm:$0xf]
  %v30 = vld [vmem:[%s1 + $0xc] sm:$0xf]
  %v31 = vld [vmem:[%s1 + $0x10] sm:$0xf]
  %v32 = vld [vmem:[%s1 + $0x14] sm:$0xf]
  %v33 = vld [vmem:[%s1 + $0x18] sm:$0xf]
  %v34 = vld [vmem:[%s1 + $0x1c] sm:$0xf]
  %v35 = vld [vmem:[%s1 + $0x20] sm:$0xf]
  %v36 = vld [vmem:[%s1 + $0x24] sm:$0xf]
  %v37 = vld [vmem:[%s1 + $0x28] sm:$0xf]
  %v38 = vld [vmem:[%s1 + $0x2c] sm:$0xf]
  %v39 = vld [vmem:[%s1 + $0x30] sm:$0xf]
  %v40 = vld [vmem:[%s1 + $0x34] sm:$0xf]
  %v41 = vld [vmem:[%s1 + $0x38] sm:$0xf]
  %v42 = vld [vmem:[%s1 + $0x3c] sm:$0xf]
  %v59 = vunpack.c.l.b16 %v11
  %v60 = vunpack.c.l.b16 %v12
  %v61 = vunpack.c.l.b16 %v13
  %v62 = vunpack.c.l.b16 %v14
  %v63 = vunpack.c.l.b16 %v15
  %v64 = vunpack.c.l.b16 %v16
  %v65 = vunpack.c.l.b16 %v17
  %v66 = vunpack.c.l.b16 %v18
  %v67 = vunpack.c.l.b16 %v19
  %v68 = vunpack.c.l.b16 %v20
  %v69 = vunpack.c.l.b16 %v21
  %v70 = vunpack.c.l.b16 %v22
  %v71 = vunpack.c.l.b16 %v23
  %v72 = vunpack.c.l.b16 %v24
  %v73 = vunpack.c.l.b16 %v25
  %v74 = vunpack.c.l.b16 %v26
  %v75 = vpack.c.b16 %v60, %v59
  %v76 = vpack.c.b16 %v62, %v61
  %v77 = vpack.c.b16 %v64, %v63
  %v78 = vpack.c.b16 %v66, %v65
  %v79 = vpack.c.b16 %v68, %v67
  %v80 = vpack.c.b16 %v70, %v69
  %v81 = vpack.c.b16 %v72, %v71
  %v82 = vpack.c.b16 %v74, %v73
  %v107 = vunpack.c.l.b16 %v27
  %v108 = vunpack.c.l.b16 %v28
  %v109 = vunpack.c.l.b16 %v29
  %v110 = vunpack.c.l.b16 %v30
  %v111 = vunpack.c.l.b16 %v31
  %v112 = vunpack.c.l.b16 %v32
  %v113 = vunpack.c.l.b16 %v33
  %v114 = vunpack.c.l.b16 %v34
  %v115 = vunpack.c.l.b16 %v35
  %v116 = vunpack.c.l.b16 %v36
  %v117 = vunpack.c.l.b16 %v37
  %v118 = vunpack.c.l.b16 %v38
  %v119 = vunpack.c.l.b16 %v39
  %v120 = vunpack.c.l.b16 %v40
  %v121 = vunpack.c.l.b16 %v41
  %v122 = vunpack.c.l.b16 %v42
  %v123 = vpack.c.b16 %v108, %v107
  %v124 = vpack.c.b16 %v110, %v109
  %v125 = vpack.c.b16 %v112, %v111
  %v126 = vpack.c.b16 %v114, %v113
  %v127 = vpack.c.b16 %v116, %v115
  %v128 = vpack.c.b16 %v118, %v117
  %v129 = vpack.c.b16 %v120, %v119
  %v130 = vpack.c.b16 %v122, %v121
  %139 = vmatpush.bf16.msra.mxu0 %v130
  %140 = vmatpush.bf16.msra.mxu0 %v129
  %141 = vmatpush.bf16.msra.mxu0 %v128
  %142 = vmatpush.bf16.msra.mxu0 %v127
  %143 = vmatpush.bf16.msra.mxu0 %v126
  %144 = vmatpush.bf16.msra.mxu0 %v125
  %145 = vmatpush.bf16.msra.mxu0 %v124
  %146 = vmatpush.bf16.msra.mxu0 %v123
  %147 = vmatmul.bf16.gmra.mxu0 %v75
  %v148 = vpop.f32.mrf.mxu0
  %v149 = vadd.f32 0.0, %v148
  %v150 = vpop.f32.mrf.mxu0
  %v151 = vadd.f32 0.0, %v150
  %152 = vmatmul.bf16.gmra.mxu0 %v76
  %v153 = vpop.f32.mrf.mxu0
  %v154 = vadd.f32 0.0, %v153
  %v155 = vpop.f32.mrf.mxu0
  %v156 = vadd.f32 0.0, %v155
  %157 = vmatmul.bf16.gmra.mxu0 %v77
  %v158 = vpop.f32.mrf.mxu0
  %v159 = vadd.f32 0.0, %v158
  %v160 = vpop.f32.mrf.mxu0
  %v161 = vadd.f32 0.0, %v160
  %162 = vmatmul.bf16.gmra.mxu0 %v78
  %v163 = vpop.f32.mrf.mxu0
  %v164 = vadd.f32 0.0, %v163
  %v165 = vpop.f32.mrf.mxu0
  %v166 = vadd.f32 0.0, %v165
  %167 = vmatmul.bf16.gmra.mxu0 %v79
  %v168 = vpop.f32.mrf.mxu0
  %v169 = vadd.f32 0.0, %v168
  %v170 = vpop.f32.mrf.mxu0
  %v171 = vadd.f32 0.0, %v170
  %172 = vmatmul.bf16.gmra.mxu0 %v80
  %v173 = vpop.f32.mrf.mxu0
  %v174 = vadd.f32 0.0, %v173
  %v175 = vpop.f32.mrf.mxu0
  %v176 = vadd.f32 0.0, %v175
  %177 = vmatmul.bf16.gmra.mxu0 %v81
  %v178 = vpop.f32.mrf.mxu0
  %v179 = vadd.f32 0.0, %v178
  %v180 = vpop.f32.mrf.mxu0
  %v181 = vadd.f32 0.0, %v180
  %182 = vmatmul.bf16.gmra.mxu0 %v82
  %v183 = vpop.f32.mrf.mxu0
  %v184 = vadd.f32 0.0, %v183
  %v185 = vpop.f32.mrf.mxu0
  %v186 = vadd.f32 0.0, %v185
  %187 = vdwg.mxu0
  %vm188 = vcmask 7168
  %189 = vst.msk [vmem:[%s2] sm:$0xff] %vm188, %v149
  %190 = vst.msk [vmem:[%s2 + $0x8] sm:$0xff] %vm188, %v151
  %191 = vst.msk [vmem:[%s2 + $0x10] sm:$0xff] %vm188, %v154
  %192 = vst.msk [vmem:[%s2 + $0x18] sm:$0xff] %vm188, %v156
  %193 = vst.msk [vmem:[%s2 + $0x20] sm:$0xff] %vm188, %v159
  %194 = vst.msk [vmem:[%s2 + $0x28] sm:$0xff] %vm188, %v161
  %195 = vst.msk [vmem:[%s2 + $0x30] sm:$0xff] %vm188, %v164
  %196 = vst.msk [vmem:[%s2 + $0x38] sm:$0xff] %vm188, %v166
  %197 = vst.msk [vmem:[%s2 + $0x40] sm:$0xff] %vm188, %v169
  %198 = vst.msk [vmem:[%s2 + $0x48] sm:$0xff] %vm188, %v171
  %199 = vst.msk [vmem:[%s2 + $0x50] sm:$0xff] %vm188, %v174
  %200 = vst.msk [vmem:[%s2 + $0x58] sm:$0xff] %vm188, %v176
  %201 = vst.msk [vmem:[%s2 + $0x60] sm:$0xff] %vm188, %v179
  %202 = vst.msk [vmem:[%s2 + $0x68] sm:$0xff] %vm188, %v181
  %203 = vst.msk [vmem:[%s2 + $0x70] sm:$0xff] %vm188, %v184
  %204 = vst.msk [vmem:[%s2 + $0x78] sm:$0xff] %vm188, %v186
  // Predicated region
  $region10: #{ugd_forward_dense.1} parent=0 // pred_check
    _
  $region11: #{ugd_forward_dense.1} parent=0 // pred_check_branch
    %206 = sbr.rel (0) target = $region13
  $region12: #{ugd_forward_dense.1} parent=0 // pred_region
    _
  $region13: #{ugd_forward_dense.1} parent=0 // pred_fallthru
    _
  // Predicated region
  $region14: #{ugd_forward_dense.1} parent=0 // pred_check
    _
  $region15: #{ugd_forward_dense.1} parent=0 // pred_check_branch
    %208 = sbr.rel (0) target = $region17
  $region16: #{ugd_forward_dense.1} parent=0 // pred_region
    _
  $region17: #{ugd_forward_dense.1} parent=0 // pred_fallthru
    _

</llo_original>
